<compile_context>
chip_gen: v7x
topology: tpu7x:2x2x1
jax: 0.10.0
libtpu: 0.0.40
codegen_flags: <defaults>
</compile_context>

<pallas_src>
import functools

import jax
import jax.numpy as jnp
import numpy as np
from jax.experimental import pallas as pl
from jax.experimental.pallas import tpu as pltpu


def _round_up(x, m):
    return ((x + m - 1) // m) * m


def _row_multiple(dtype):
    # Sublane packing: 8 rows/vreg for 4-byte, 16 for 2-byte, 32 for 1-byte.
    itemsize = int(jnp.dtype(dtype).itemsize)
    return max(8, 32 // itemsize)


def _pad2d(x, rows, cols):
    pr = rows - x.shape[0]
    pc = cols - x.shape[1]
    if pr or pc:
        x = jnp.pad(x, ((0, pr), (0, pc)))
    return x


# ----------------------------------------------------------------------------
# RBF MMD kernel (single-shot, everything resident in VMEM at these sizes)
# ----------------------------------------------------------------------------
def _mmd_rbf_kernel(src_ref, tgt_ref, o_ref, *, bs, bt, kernel_mul, kernel_num,
                    fix_sigma, gram_dtype):
    src = src_ref[...]                      # (bs_pad, d_pad), native dtype
    tgt = tgt_ref[...]                      # (bt_pad, d_pad), native dtype
    bs_pad = src.shape[0]
    bt_pad = tgt.shape[0]

    # Optional low-precision Gram path (bf16 MXU).  Row norms below are taken
    # from the SAME rounded values so the l2 diagonal stays ~0.
    if gram_dtype is not None:
        gd = jnp.dtype(gram_dtype)
        if src.dtype != gd:
            src = src.astype(gd)
            tgt = tgt.astype(gd)
    src_f = src.astype(jnp.float32)
    tgt_f = tgt.astype(jnp.float32)

    # Row norms in f32.
    sq_s = jnp.sum(src_f * src_f, axis=1, keepdims=True)      # (bs_pad, 1)
    sq_t = jnp.sum(tgt_f * tgt_f, axis=1, keepdims=True)      # (bt_pad, 1)

    # Gram blocks: contract the last dim of BOTH operands -> transpose-free
    # MXU matmuls with f32 accumulation.
    dn = (((1,), (1,)), ((), ()))
    g_ss = jax.lax.dot_general(src, src, dn, preferred_element_type=jnp.float32)
    g_tt = jax.lax.dot_general(tgt, tgt, dn, preferred_element_type=jnp.float32)
    g_st = jax.lax.dot_general(src, tgt, dn, preferred_element_type=jnp.float32)

    # Pairwise squared distances per quadrant (zero-padded features are inert).
    l2_ss = jnp.maximum(sq_s + sq_s.T - 2.0 * g_ss, 0.0)
    l2_tt = jnp.maximum(sq_t + sq_t.T - 2.0 * g_tt, 0.0)
    l2_st = jnp.maximum(sq_s + sq_t.T - 2.0 * g_st, 0.0)

    has_pad = (bs_pad > bs) or (bt_pad > bt)

    # ---- bandwidth heuristic over the full (n x n) pairwise matrix ---------
    n = bs + bt
    if fix_sigma is not None:
        bandwidth = jnp.float32(fix_sigma)
    else:
        if has_pad:
            vs = (jax.lax.broadcasted_iota(jnp.int32, (bs_pad, 1), 0)
                  < bs).astype(jnp.float32)
            vt = (jax.lax.broadcasted_iota(jnp.int32, (bt_pad, 1), 0)
                  < bt).astype(jnp.float32)

            def msum(x, rv, cv):
                # Row/col validity fused into the reduction; no (N, N) mask
                # array is ever materialized or kept live.
                return jnp.sum(jnp.sum(x * cv.T, axis=1, keepdims=True) * rv)

            l2_sum = (msum(l2_ss, vs, vs) + msum(l2_tt, vt, vt)
                      + 2.0 * msum(l2_st, vs, vt))     # st block appears twice
        else:
            l2_sum = jnp.sum(l2_ss) + jnp.sum(l2_tt) + 2.0 * jnp.sum(l2_st)
        bandwidth = l2_sum / jnp.float32(n * n - n)
    bandwidth = bandwidth / jnp.float32(kernel_mul ** (kernel_num // 2))

    # ---- fold row validity into the distances ONCE --------------------------
    # Padded rows/cols get a huge l2 so exp() -> 0 for every scale; the scale
    # loop below then needs no masks at all.
    if has_pad:
        big = jnp.float32(1e30)

        def mask_pad(x, nr, nc):
            rmask = jax.lax.broadcasted_iota(jnp.int32, (x.shape[0], 1), 0) < nr
            cmask = jax.lax.broadcasted_iota(jnp.int32, (1, x.shape[1]), 1) < nc
            return jnp.where(jnp.logical_and(rmask, cmask), x, big)

        l2_ss = mask_pad(l2_ss, bs, bs)
        l2_tt = mask_pad(l2_tt, bt, bt)
        l2_st = mask_pad(l2_st, bs, bt)

    # ---- multi-scale exp sums ------------------------------------------------
    # One scalar reciprocal of the bandwidth; each scale is a single scalar
    # multiply, then one VPU mul + one EUP exp per element, reduced straight
    # into scalar accumulators (no N^2 kernel matrix, no base_* pass).
    neg_inv_bw = jnp.float32(-1.0) / bandwidth
    inv_mul = 1.0 / float(kernel_mul)

    def scale_body(_, carry):
        s_xx, s_yy, s_xy, scale = carry
        factor = neg_inv_bw * scale
        s_xx = s_xx + jnp.sum(jnp.exp(l2_ss * factor))
        s_yy = s_yy + jnp.sum(jnp.exp(l2_tt * factor))
        s_xy = s_xy + jnp.sum(jnp.exp(l2_st * factor))
        return s_xx, s_yy, s_xy, scale * inv_mul

    init = (jnp.float32(0.0), jnp.float32(0.0), jnp.float32(0.0),
            jnp.float32(1.0))
    s_xx, s_yy, s_xy, _ = jax.lax.fori_loop(0, kernel_num, scale_body, init,
                                            unroll=True)

    # XX + YY - XY - YX, with XY == YX by symmetry of the kernel matrix.
    loss = (s_xx / jnp.float32(bs * bs)
            + s_yy / jnp.float32(bt * bt)
            - 2.0 * s_xy / jnp.float32(bs * bt))
    o_ref[0, 0] = loss


# ----------------------------------------------------------------------------
# Linear MMD kernel (toy-sized; single un-gridded call is the right shape here)
# ----------------------------------------------------------------------------
def _mmd_linear_kernel(src_ref, tgt_ref, o_ref):
    delta = (jnp.mean(src_ref[...].astype(jnp.float32), axis=0)
             - jnp.mean(tgt_ref[...].astype(jnp.float32), axis=0))
    o_ref[0, 0] = jnp.sum(delta * delta)


# ----------------------------------------------------------------------------
# Wrapper mirroring MMD_loss.forward
# ----------------------------------------------------------------------------
def mmd_loss(source, target, *, kernel_type="rbf", kernel_mul=2.0,
             kernel_num=5, fix_sigma=None, gram_dtype=None):
    """MMD loss forward pass.  source: (Bs, D), target: (Bt, D)."""
    if kernel_type == "linear":
        out = pl.pallas_call(
            _mmd_linear_kernel,
            out_shape=jax.ShapeDtypeStruct((1, 1), jnp.float32),
            in_specs=[
                pl.BlockSpec(memory_space=pltpu.VMEM),
                pl.BlockSpec(memory_space=pltpu.VMEM),
            ],
            out_specs=pl.BlockSpec(memory_space=pltpu.SMEM),
        )(source, target)
        return out[0, 0]

    elif kernel_type == "rbf":
        bs, d = int(source.shape[0]), int(source.shape[1])
        bt = int(target.shape[0])
        assert int(target.shape[1]) == d, "source/target feature dims differ"

        # Lane/sublane alignment: features -> multiple of 128 lanes; rows ->
        # dtype-aware sublane multiple (8 for f32, 16 for bf16, 32 for int8).
        row_mult = _row_multiple(source.dtype)
        bs_pad = _round_up(bs, row_mult)
        bt_pad = _round_up(bt, row_mult)
        d_pad = _round_up(d, 128)
        # TODO(synk): in the future tiled version, fold the D tail into a
        # masked final K tile instead of this HBM-copying pad of the inputs.
        src_p = _pad2d(source, bs_pad, d_pad)
        tgt_p = _pad2d(target, bt_pad, d_pad)

        # Scoped-VMEM budget from the actual resident set (inputs + three f32
        # pairwise blocks + Gram/exp temporaries) with headroom; raises the
        # 16/32 MiB scoped defaults as N grows, capped at v7x's 64 MiB.
        itemsize = int(jnp.dtype(source.dtype).itemsize)
        in_bytes = (bs_pad + bt_pad) * d_pad * itemsize
        blk_bytes = (bs_pad * bs_pad + bt_pad * bt_pad + bs_pad * bt_pad) * 4
        vmem_limit = int(min(max(2 * in_bytes + 8 * blk_bytes + (4 << 20),
                                 32 << 20), 64 << 20))

        kernel = functools.partial(
            _mmd_rbf_kernel,
            bs=bs, bt=bt,
            kernel_mul=float(kernel_mul),
            kernel_num=int(kernel_num),
            fix_sigma=None if fix_sigma is None else float(fix_sigma),
            gram_dtype=gram_dtype,
        )
        out = pl.pallas_call(
            kernel,
            out_shape=jax.ShapeDtypeStruct((1, 1), jnp.float32),
            in_specs=[
                pl.BlockSpec(memory_space=pltpu.VMEM),
                pl.BlockSpec(memory_space=pltpu.VMEM),
            ],
            out_specs=pl.BlockSpec(memory_space=pltpu.SMEM),
            compiler_params=pltpu.CompilerParams(vmem_limit_bytes=vmem_limit),
        )(src_p, tgt_p)
        return out[0, 0]

    else:
        raise ValueError(f"unknown kernel_type: {kernel_type}")


# ----------------------------------------------------------------------------
# Pure-JAX references (mirror the PyTorch module exactly)
# ----------------------------------------------------------------------------
def _mmd_rbf_ref(source, target, kernel_mul=2.0, kernel_num=5):
    b = source.shape[0]
    total = jnp.concatenate([source, target], axis=0).astype(jnp.float32)
    n = total.shape[0]
    diff = total[:, None, :] - total[None, :, :]
    l2 = jnp.sum(diff * diff, axis=-1)
    bw = jnp.sum(l2) / (n * n - n)
    bw = bw / (kernel_mul ** (kernel_num // 2))
    kern = sum(jnp.exp(-l2 / (bw * (kernel_mul ** i))) for i in range(kernel_num))
    return (jnp.mean(kern[:b, :b]) + jnp.mean(kern[b:, b:])
            - jnp.mean(kern[:b, b:]) - jnp.mean(kern[b:, :b]))


def _mmd_linear_ref(source, target):
    delta = (jnp.mean(source.astype(jnp.float32), axis=0)
             - jnp.mean(target.astype(jnp.float32), axis=0))
    return jnp.sum(delta * delta)


if __name__ == "__main__":
    key = jax.random.PRNGKey(0)
    k0, k1, k2, k3 = jax.random.split(key, 4)

    # --- rbf, aligned row counts (batch=8 per domain, feature=32) -----------
    src = jax.random.normal(k0, (8, 32), dtype=jnp.float32)
    tgt = jax.random.normal(k1, (8, 32), dtype=jnp.float32) + 0.5
    loss_rbf = mmd_loss(src, tgt, kernel_type="rbf",
                        kernel_mul=2.0, kernel_num=5)
    jax.block_until_ready(loss_rbf)
    np.testing.assert_allclose(np.asarray(loss_rbf),
                               np.asarray(_mmd_rbf_ref(src, tgt, 2.0, 5)),
                               rtol=1e-2, atol=1e-4)

    # --- rbf, unaligned row counts (exercises the padded-row masking) -------
    src_u = jax.random.normal(k2, (6, 32), dtype=jnp.float32)
    tgt_u = jax.random.normal(k3, (10, 32), dtype=jnp.float32) + 0.5
    loss_u = mmd_loss(src_u, tgt_u, kernel_type="rbf",
                      kernel_mul=2.0, kernel_num=5)
    jax.block_until_ready(loss_u)
    np.testing.assert_allclose(np.asarray(loss_u),
                               np.asarray(_mmd_rbf_ref(src_u, tgt_u, 2.0, 5)),
                               rtol=1e-2, atol=1e-4)

    # --- rbf, bf16 inputs (native bf16 Gram on the MXU, 16-row padding) -----
    src_b = src.astype(jnp.bfloat16)
    tgt_b = tgt.astype(jnp.bfloat16)
    loss_bf = mmd_loss(src_b, tgt_b, kernel_type="rbf",
                       kernel_mul=2.0, kernel_num=5)
    jax.block_until_ready(loss_bf)
    np.testing.assert_allclose(np.asarray(loss_bf),
                               np.asarray(_mmd_rbf_ref(src_b, tgt_b, 2.0, 5)),
                               rtol=1e-2, atol=1e-3)

    # --- linear --------------------------------------------------------------
    loss_lin = mmd_loss(src, tgt, kernel_type="linear")
    jax.block_until_ready(loss_lin)
    np.testing.assert_allclose(np.asarray(loss_lin),
                               np.asarray(_mmd_linear_ref(src, tgt)),
                               rtol=1e-2, atol=1e-4)

    print("KERNEL_OK")
</pallas_src>

<mosaic_0001>
module attributes {stable_mosaic.version = 11 : i64} {
  func.func @_mmd_rbf_kernel(%arg0: memref<8x128xf32, #tpu.memory_space<vmem>>, %arg1: memref<8x128xf32, #tpu.memory_space<vmem>>, %arg2: memref<1x1xf32, #tpu.memory_space<smem>>) attributes {dimension_semantics = [], scalar_prefetch = 0 : i64, scratch_operands = 0 : i64, tpu.core_type = #tpu.core_type<tc>} {
    %c0 = arith.constant 0 : index
    %c0_0 = arith.constant 0 : index
    %0 = vector.load %arg0[%c0, %c0_0] : memref<8x128xf32, #tpu.memory_space<vmem>>, vector<8x128xf32>
    %c0_1 = arith.constant 0 : index
    %c0_2 = arith.constant 0 : index
    %1 = vector.load %arg1[%c0_1, %c0_2] : memref<8x128xf32, #tpu.memory_space<vmem>>, vector<8x128xf32>
    %2 = arith.mulf %0, %0 : vector<8x128xf32>
    %cst = arith.constant dense<0.000000e+00> : vector<8xf32>
    %3 = vector.multi_reduction <add>, %2, %cst [1] : vector<8x128xf32> to vector<8xf32>
    %4 = vector.shape_cast %3 : vector<8xf32> to vector<8x1xf32>
    %5 = arith.mulf %1, %1 : vector<8x128xf32>
    %cst_3 = arith.constant dense<0.000000e+00> : vector<8xf32>
    %6 = vector.multi_reduction <add>, %5, %cst_3 [1] : vector<8x128xf32> to vector<8xf32>
    %7 = vector.shape_cast %6 : vector<8xf32> to vector<8x1xf32>
    %cst_4 = arith.constant dense<0.000000e+00> : vector<8x8xf32>
    %8 = tpu.matmul %0, %0, %cst_4 {dimension_numbers = #tpu.dot_dimension_numbers<[1], [1], [0], [0], [0, 0, 1, 0], [], []>} : vector<8x128xf32>, vector<8x128xf32>, vector<8x8xf32> -> vector<8x8xf32>
    %cst_5 = arith.constant dense<0.000000e+00> : vector<8x8xf32>
    %9 = tpu.matmul %1, %1, %cst_5 {dimension_numbers = #tpu.dot_dimension_numbers<[1], [1], [0], [0], [0, 0, 1, 0], [], []>} : vector<8x128xf32>, vector<8x128xf32>, vector<8x8xf32> -> vector<8x8xf32>
    %cst_6 = arith.constant dense<0.000000e+00> : vector<8x8xf32>
    %10 = tpu.matmul %0, %1, %cst_6 {dimension_numbers = #tpu.dot_dimension_numbers<[1], [1], [0], [0], [0, 0, 1, 0], [], []>} : vector<8x128xf32>, vector<8x128xf32>, vector<8x8xf32> -> vector<8x8xf32>
    %11 = tpu.transpose %4, [1, 0] : vector<8x1xf32> -> vector<1x8xf32>
    %12 = vector.broadcast %4 : vector<8x1xf32> to vector<8x8xf32>
    %13 = vector.broadcast %11 : vector<1x8xf32> to vector<8x8xf32>
    %14 = arith.addf %12, %13 : vector<8x8xf32>
    %cst_7 = arith.constant 2.000000e+00 : f32
    %15 = vector.broadcast %cst_7 : f32 to vector<8x8xf32>
    %16 = arith.mulf %15, %8 : vector<8x8xf32>
    %17 = arith.subf %14, %16 : vector<8x8xf32>
    %cst_8 = arith.constant 0.000000e+00 : f32
    %18 = vector.broadcast %cst_8 : f32 to vector<8x8xf32>
    %19 = arith.maximumf %17, %18 : vector<8x8xf32>
    %20 = tpu.transpose %7, [1, 0] : vector<8x1xf32> -> vector<1x8xf32>
    %21 = vector.broadcast %7 : vector<8x1xf32> to vector<8x8xf32>
    %22 = vector.broadcast %20 : vector<1x8xf32> to vector<8x8xf32>
    %23 = arith.addf %21, %22 : vector<8x8xf32>
    %cst_9 = arith.constant 2.000000e+00 : f32
    %24 = vector.broadcast %cst_9 : f32 to vector<8x8xf32>
    %25 = arith.mulf %24, %9 : vector<8x8xf32>
    %26 = arith.subf %23, %25 : vector<8x8xf32>
    %cst_10 = arith.constant 0.000000e+00 : f32
    %27 = vector.broadcast %cst_10 : f32 to vector<8x8xf32>
    %28 = arith.maximumf %26, %27 : vector<8x8xf32>
    %29 = tpu.transpose %7, [1, 0] : vector<8x1xf32> -> vector<1x8xf32>
    %30 = vector.broadcast %4 : vector<8x1xf32> to vector<8x8xf32>
    %31 = vector.broadcast %29 : vector<1x8xf32> to vector<8x8xf32>
    %32 = arith.addf %30, %31 : vector<8x8xf32>
    %cst_11 = arith.constant 2.000000e+00 : f32
    %33 = vector.broadcast %cst_11 : f32 to vector<8x8xf32>
    %34 = arith.mulf %33, %10 : vector<8x8xf32>
    %35 = arith.subf %32, %34 : vector<8x8xf32>
    %cst_12 = arith.constant 0.000000e+00 : f32
    %36 = vector.broadcast %cst_12 : f32 to vector<8x8xf32>
    %37 = arith.maximumf %35, %36 : vector<8x8xf32>
    %38 = vector.shape_cast %19 : vector<8x8xf32> to vector<1x8x8xf32>
    %cst_13 = arith.constant dense<0.000000e+00> : vector<1xf32>
    %39 = vector.multi_reduction <add>, %38, %cst_13 [1, 2] : vector<1x8x8xf32> to vector<1xf32>
    %40 = vector.shape_cast %39 : vector<1xf32> to vector<1x1x1xf32>
    %41 = vector.extract %40[0, 0, 0] : f32 from vector<1x1x1xf32>
    %42 = vector.shape_cast %28 : vector<8x8xf32> to vector<1x8x8xf32>
    %cst_14 = arith.constant dense<0.000000e+00> : vector<1xf32>
    %43 = vector.multi_reduction <add>, %42, %cst_14 [1, 2] : vector<1x8x8xf32> to vector<1xf32>
    %44 = vector.shape_cast %43 : vector<1xf32> to vector<1x1x1xf32>
    %45 = vector.extract %44[0, 0, 0] : f32 from vector<1x1x1xf32>
    %46 = arith.addf %41, %45 : f32
    %47 = vector.shape_cast %37 : vector<8x8xf32> to vector<1x8x8xf32>
    %cst_15 = arith.constant dense<0.000000e+00> : vector<1xf32>
    %48 = vector.multi_reduction <add>, %47, %cst_15 [1, 2] : vector<1x8x8xf32> to vector<1xf32>
    %49 = vector.shape_cast %48 : vector<1xf32> to vector<1x1x1xf32>
    %50 = vector.extract %49[0, 0, 0] : f32 from vector<1x1x1xf32>
    %cst_16 = arith.constant 2.000000e+00 : f32
    %51 = arith.mulf %cst_16, %50 : f32
    %52 = arith.addf %46, %51 : f32
    %cst_17 = arith.constant 2.400000e+02 : f32
    %53 = arith.divf %52, %cst_17 : f32
    %cst_18 = arith.constant 4.000000e+00 : f32
    %54 = arith.divf %53, %cst_18 : f32
    %cst_19 = arith.constant -1.000000e+00 : f32
    %55 = arith.divf %cst_19, %54 : f32
    %cst_20 = arith.constant 0.000000e+00 : f32
    %cst_21 = arith.constant 0.000000e+00 : f32
    %cst_22 = arith.constant 0.000000e+00 : f32
    %cst_23 = arith.constant 1.000000e+00 : f32
    %c0_i32 = arith.constant 0 : i32
    %56 = arith.mulf %55, %cst_23 : f32
    %57 = vector.broadcast %56 : f32 to vector<8x8xf32>
    %58 = arith.mulf %19, %57 : vector<8x8xf32>
    %59 = math.exp %58 : vector<8x8xf32>
    %60 = vector.shape_cast %59 : vector<8x8xf32> to vector<1x8x8xf32>
    %cst_24 = arith.constant dense<0.000000e+00> : vector<1xf32>
    %61 = vector.multi_reduction <add>, %60, %cst_24 [1, 2] : vector<1x8x8xf32> to vector<1xf32>
    %62 = vector.shape_cast %61 : vector<1xf32> to vector<1x1x1xf32>
    %63 = vector.extract %62[0, 0, 0] : f32 from vector<1x1x1xf32>
    %64 = arith.addf %cst_20, %63 : f32
    %65 = vector.broadcast %56 : f32 to vector<8x8xf32>
    %66 = arith.mulf %28, %65 : vector<8x8xf32>
    %67 = math.exp %66 : vector<8x8xf32>
    %68 = vector.shape_cast %67 : vector<8x8xf32> to vector<1x8x8xf32>
    %cst_25 = arith.constant dense<0.000000e+00> : vector<1xf32>
    %69 = vector.multi_reduction <add>, %68, %cst_25 [1, 2] : vector<1x8x8xf32> to vector<1xf32>
    %70 = vector.shape_cast %69 : vector<1xf32> to vector<1x1x1xf32>
    %71 = vector.extract %70[0, 0, 0] : f32 from vector<1x1x1xf32>
    %72 = arith.addf %cst_21, %71 : f32
    %73 = vector.broadcast %56 : f32 to vector<8x8xf32>
    %74 = arith.mulf %37, %73 : vector<8x8xf32>
    %75 = math.exp %74 : vector<8x8xf32>
    %76 = vector.shape_cast %75 : vector<8x8xf32> to vector<1x8x8xf32>
    %cst_26 = arith.constant dense<0.000000e+00> : vector<1xf32>
    %77 = vector.multi_reduction <add>, %76, %cst_26 [1, 2] : vector<1x8x8xf32> to vector<1xf32>
    %78 = vector.shape_cast %77 : vector<1xf32> to vector<1x1x1xf32>
    %79 = vector.extract %78[0, 0, 0] : f32 from vector<1x1x1xf32>
    %80 = arith.addf %cst_22, %79 : f32
    %cst_27 = arith.constant 5.000000e-01 : f32
    %81 = arith.mulf %cst_23, %cst_27 : f32
    %c1_i32 = arith.constant 1 : i32
    %82 = arith.mulf %55, %81 : f32
    %83 = vector.broadcast %82 : f32 to vector<8x8xf32>
    %84 = arith.mulf %19, %83 : vector<8x8xf32>
    %85 = math.exp %84 : vector<8x8xf32>
    %86 = vector.shape_cast %85 : vector<8x8xf32> to vector<1x8x8xf32>
    %cst_28 = arith.constant dense<0.000000e+00> : vector<1xf32>
    %87 = vector.multi_reduction <add>, %86, %cst_28 [1, 2] : vector<1x8x8xf32> to vector<1xf32>
    %88 = vector.shape_cast %87 : vector<1xf32> to vector<1x1x1xf32>
    %89 = vector.extract %88[0, 0, 0] : f32 from vector<1x1x1xf32>
    %90 = arith.addf %64, %89 : f32
    %91 = vector.broadcast %82 : f32 to vector<8x8xf32>
    %92 = arith.mulf %28, %91 : vector<8x8xf32>
    %93 = math.exp %92 : vector<8x8xf32>
    %94 = vector.shape_cast %93 : vector<8x8xf32> to vector<1x8x8xf32>
    %cst_29 = arith.constant dense<0.000000e+00> : vector<1xf32>
    %95 = vector.multi_reduction <add>, %94, %cst_29 [1, 2] : vector<1x8x8xf32> to vector<1xf32>
    %96 = vector.shape_cast %95 : vector<1xf32> to vector<1x1x1xf32>
    %97 = vector.extract %96[0, 0, 0] : f32 from vector<1x1x1xf32>
    %98 = arith.addf %72, %97 : f32
    %99 = vector.broadcast %82 : f32 to vector<8x8xf32>
    %100 = arith.mulf %37, %99 : vector<8x8xf32>
    %101 = math.exp %100 : vector<8x8xf32>
    %102 = vector.shape_cast %101 : vector<8x8xf32> to vector<1x8x8xf32>
    %cst_30 = arith.constant dense<0.000000e+00> : vector<1xf32>
    %103 = vector.multi_reduction <add>, %102, %cst_30 [1, 2] : vector<1x8x8xf32> to vector<1xf32>
    %104 = vector.shape_cast %103 : vector<1xf32> to vector<1x1x1xf32>
    %105 = vector.extract %104[0, 0, 0] : f32 from vector<1x1x1xf32>
    %106 = arith.addf %80, %105 : f32
    %cst_31 = arith.constant 5.000000e-01 : f32
    %107 = arith.mulf %81, %cst_31 : f32
    %c2_i32 = arith.constant 2 : i32
    %108 = arith.mulf %55, %107 : f32
    %109 = vector.broadcast %108 : f32 to vector<8x8xf32>
    %110 = arith.mulf %19, %109 : vector<8x8xf32>
    %111 = math.exp %110 : vector<8x8xf32>
    %112 = vector.shape_cast %111 : vector<8x8xf32> to vector<1x8x8xf32>
    %cst_32 = arith.constant dense<0.000000e+00> : vector<1xf32>
    %113 = vector.multi_reduction <add>, %112, %cst_32 [1, 2] : vector<1x8x8xf32> to vector<1xf32>
    %114 = vector.shape_cast %113 : vector<1xf32> to vector<1x1x1xf32>
    %115 = vector.extract %114[0, 0, 0] : f32 from vector<1x1x1xf32>
    %116 = arith.addf %90, %115 : f32
    %117 = vector.broadcast %108 : f32 to vector<8x8xf32>
    %118 = arith.mulf %28, %117 : vector<8x8xf32>
    %119 = math.exp %118 : vector<8x8xf32>
    %120 = vector.shape_cast %119 : vector<8x8xf32> to vector<1x8x8xf32>
    %cst_33 = arith.constant dense<0.000000e+00> : vector<1xf32>
    %121 = vector.multi_reduction <add>, %120, %cst_33 [1, 2] : vector<1x8x8xf32> to vector<1xf32>
    %122 = vector.shape_cast %121 : vector<1xf32> to vector<1x1x1xf32>
    %123 = vector.extract %122[0, 0, 0] : f32 from vector<1x1x1xf32>
    %124 = arith.addf %98, %123 : f32
    %125 = vector.broadcast %108 : f32 to vector<8x8xf32>
    %126 = arith.mulf %37, %125 : vector<8x8xf32>
    %127 = math.exp %126 : vector<8x8xf32>
    %128 = vector.shape_cast %127 : vector<8x8xf32> to vector<1x8x8xf32>
    %cst_34 = arith.constant dense<0.000000e+00> : vector<1xf32>
    %129 = vector.multi_reduction <add>, %128, %cst_34 [1, 2] : vector<1x8x8xf32> to vector<1xf32>
    %130 = vector.shape_cast %129 : vector<1xf32> to vector<1x1x1xf32>
    %131 = vector.extract %130[0, 0, 0] : f32 from vector<1x1x1xf32>
    %132 = arith.addf %106, %131 : f32
    %cst_35 = arith.constant 5.000000e-01 : f32
    %133 = arith.mulf %107, %cst_35 : f32
    %c3_i32 = arith.constant 3 : i32
    %134 = arith.mulf %55, %133 : f32
    %135 = vector.broadcast %134 : f32 to vector<8x8xf32>
    %136 = arith.mulf %19, %135 : vector<8x8xf32>
    %137 = math.exp %136 : vector<8x8xf32>
    %138 = vector.shape_cast %137 : vector<8x8xf32> to vector<1x8x8xf32>
    %cst_36 = arith.constant dense<0.000000e+00> : vector<1xf32>
    %139 = vector.multi_reduction <add>, %138, %cst_36 [1, 2] : vector<1x8x8xf32> to vector<1xf32>
    %140 = vector.shape_cast %139 : vector<1xf32> to vector<1x1x1xf32>
    %141 = vector.extract %140[0, 0, 0] : f32 from vector<1x1x1xf32>
    %142 = arith.addf %116, %141 : f32
    %143 = vector.broadcast %134 : f32 to vector<8x8xf32>
    %144 = arith.mulf %28, %143 : vector<8x8xf32>
    %145 = math.exp %144 : vector<8x8xf32>
    %146 = vector.shape_cast %145 : vector<8x8xf32> to vector<1x8x8xf32>
    %cst_37 = arith.constant dense<0.000000e+00> : vector<1xf32>
    %147 = vector.multi_reduction <add>, %146, %cst_37 [1, 2] : vector<1x8x8xf32> to vector<1xf32>
    %148 = vector.shape_cast %147 : vector<1xf32> to vector<1x1x1xf32>
    %149 = vector.extract %148[0, 0, 0] : f32 from vector<1x1x1xf32>
    %150 = arith.addf %124, %149 : f32
    %151 = vector.broadcast %134 : f32 to vector<8x8xf32>
    %152 = arith.mulf %37, %151 : vector<8x8xf32>
    %153 = math.exp %152 : vector<8x8xf32>
    %154 = vector.shape_cast %153 : vector<8x8xf32> to vector<1x8x8xf32>
    %cst_38 = arith.constant dense<0.000000e+00> : vector<1xf32>
    %155 = vector.multi_reduction <add>, %154, %cst_38 [1, 2] : vector<1x8x8xf32> to vector<1xf32>
    %156 = vector.shape_cast %155 : vector<1xf32> to vector<1x1x1xf32>
    %157 = vector.extract %156[0, 0, 0] : f32 from vector<1x1x1xf32>
    %158 = arith.addf %132, %157 : f32
    %cst_39 = arith.constant 5.000000e-01 : f32
    %159 = arith.mulf %133, %cst_39 : f32
    %c4_i32 = arith.constant 4 : i32
    %160 = arith.mulf %55, %159 : f32
    %161 = vector.broadcast %160 : f32 to vector<8x8xf32>
    %162 = arith.mulf %19, %161 : vector<8x8xf32>
    %163 = math.exp %162 : vector<8x8xf32>
    %164 = vector.shape_cast %163 : vector<8x8xf32> to vector<1x8x8xf32>
    %cst_40 = arith.constant dense<0.000000e+00> : vector<1xf32>
    %165 = vector.multi_reduction <add>, %164, %cst_40 [1, 2] : vector<1x8x8xf32> to vector<1xf32>
    %166 = vector.shape_cast %165 : vector<1xf32> to vector<1x1x1xf32>
    %167 = vector.extract %166[0, 0, 0] : f32 from vector<1x1x1xf32>
    %168 = arith.addf %142, %167 : f32
    %169 = vector.broadcast %160 : f32 to vector<8x8xf32>
    %170 = arith.mulf %28, %169 : vector<8x8xf32>
    %171 = math.exp %170 : vector<8x8xf32>
    %172 = vector.shape_cast %171 : vector<8x8xf32> to vector<1x8x8xf32>
    %cst_41 = arith.constant dense<0.000000e+00> : vector<1xf32>
    %173 = vector.multi_reduction <add>, %172, %cst_41 [1, 2] : vector<1x8x8xf32> to vector<1xf32>
    %174 = vector.shape_cast %173 : vector<1xf32> to vector<1x1x1xf32>
    %175 = vector.extract %174[0, 0, 0] : f32 from vector<1x1x1xf32>
    %176 = arith.addf %150, %175 : f32
    %177 = vector.broadcast %160 : f32 to vector<8x8xf32>
    %178 = arith.mulf %37, %177 : vector<8x8xf32>
    %179 = math.exp %178 : vector<8x8xf32>
    %180 = vector.shape_cast %179 : vector<8x8xf32> to vector<1x8x8xf32>
    %cst_42 = arith.constant dense<0.000000e+00> : vector<1xf32>
    %181 = vector.multi_reduction <add>, %180, %cst_42 [1, 2] : vector<1x8x8xf32> to vector<1xf32>
    %182 = vector.shape_cast %181 : vector<1xf32> to vector<1x1x1xf32>
    %183 = vector.extract %182[0, 0, 0] : f32 from vector<1x1x1xf32>
    %184 = arith.addf %158, %183 : f32
    %cst_43 = arith.constant 5.000000e-01 : f32
    %185 = arith.mulf %159, %cst_43 : f32
    %cst_44 = arith.constant 6.400000e+01 : f32
    %186 = arith.divf %168, %cst_44 : f32
    %cst_45 = arith.constant 6.400000e+01 : f32
    %187 = arith.divf %176, %cst_45 : f32
    %188 = arith.addf %186, %187 : f32
    %cst_46 = arith.constant 2.000000e+00 : f32
    %189 = arith.mulf %cst_46, %184 : f32
    %cst_47 = arith.constant 6.400000e+01 : f32
    %190 = arith.divf %189, %cst_47 : f32
    %191 = arith.subf %188, %190 : f32
    %c0_48 = arith.constant 0 : index
    %c0_49 = arith.constant 0 : index
    %192 = memref.load %arg2[%c0_48, %c0_49] : memref<1x1xf32, #tpu.memory_space<smem>>
    memref.store %191, %arg2[%c0_48, %c0_49] : memref<1x1xf32, #tpu.memory_space<smem>>
    return
  }
}

</mosaic_0001>

<llo_original>
// kernel: tpu_custom_call.1
$region0: #{tpu_custom_call.1}
  #allocation0 [shape = 'u32[]', space=smem, size = 0x4, offset = 0x4, fixed_abs, tag = 'smem constant byte address 0x4 - core index']
  #allocation1 [shape = 'u32[144,128]{1,0:T(1,128)}', space=vmem, size = 0x12000, scoped, tag = 'internal scratch']
  %s0 = inlined_call_operand.hbm [shape: f32[8,128], index: 0, kind: input, shape index: {}]
  %s1 = inlined_call_operand.hbm [shape: f32[8,128], index: 1, kind: input, shape index: {}]
  %s2 = inlined_call_operand.hbm [shape: f32[1,1], index: 2, kind: output, shape index: {}]
  %s3 = sld [smem:[#allocation0]]
  $region26: #{tpu_custom_call.1} parent=0
    _
  %s5 = ssub.s32 1, %s3
  %s6 = scalar_select 0, %s5, %s3
  $region1: #{tpu_custom_call.1} parent=0
    #allocation2 [shape = 'u8[4096]{0}', space=vmem, size = 0x1000, scoped, tag = 'input window, operand 0, single buffered']
    #allocation3 [shape = 's32[1]{0}', space=sflag, size = 0x4, scoped, tag = 'scoped memory for tpu_custom_call.1']
    #allocation4 [shape = 's32[1]{0}', space=sflag, size = 0x4, scoped, tag = 'scoped memory for tpu_custom_call.1']
    #allocation5 [shape = 'u8[4096]{0}', space=vmem, size = 0x1000, scoped, tag = 'input window, operand 1, single buffered']
    #allocation6 [shape = 's32[1]{0}', space=sflag, size = 0x4, scoped, tag = 'scoped memory for tpu_custom_call.1']
    #allocation7 [shape = 'u8[512]{0}', space=smem, size = 0x200, scoped, tag = 'output window, operand 0, single buffered']
    %7 = vsyncpa [#allocation3], 0
    %8 = vsyncpa [#allocation6], 0
    %9 = vsyncpa [#allocation4], 0
    // Predicated region
    $region2: #{tpu_custom_call.1} parent=1 // pred_check
      _
    $region3: #{tpu_custom_call.1} parent=1 // pred_check_branch
      %11 = sbr.rel (0) target = $region5
    $region4: #{tpu_custom_call.1} parent=1 // pred_region
      %s13 = ssub.s32 128, 128
      %14 = vsyncadd [#allocation3], %s13
      %s16 = sshll.u32 [#allocation2], 4
      %s17 = int_to_ptr.vmem [resolvable:$true] %s16
      %19 = dma.hbm_to_vmem [thread:$0]  %s0, 128, %s17, [#allocation3]
    $region5: #{tpu_custom_call.1} parent=1 // pred_fallthru
      _
    // Predicated region
    $region6: #{tpu_custom_call.1} parent=1 // pred_check
      _
    $region7: #{tpu_custom_call.1} parent=1 // pred_check_branch
      %21 = sbr.rel (0) target = $region9
    $region8: #{tpu_custom_call.1} parent=1 // pred_region
      %s23 = ssub.s32 128, 128
      %24 = vsyncadd [#allocation6], %s23
      %s26 = sshll.u32 [#allocation5], 4
      %s27 = int_to_ptr.vmem [resolvable:$true] %s26
      %29 = dma.hbm_to_vmem [thread:$0]  %s1, 128, %s27, [#allocation6]
    $region9: #{tpu_custom_call.1} parent=1 // pred_fallthru
      _
    // Predicated region
    $region10: #{tpu_custom_call.1} parent=1 // pred_check
      _
    $region11: #{tpu_custom_call.1} parent=1 // pred_check_branch
      %31 = sbr.rel (0) target = $region13
    $region12: #{tpu_custom_call.1} parent=1 // pred_region
      %32 = dma.done [#allocation3], 128
    $region13: #{tpu_custom_call.1} parent=1 // pred_fallthru
      _
    // Predicated region
    $region14: #{tpu_custom_call.1} parent=1 // pred_check
      _
    $region15: #{tpu_custom_call.1} parent=1 // pred_check_branch
      %34 = sbr.rel (0) target = $region17
    $region16: #{tpu_custom_call.1} parent=1 // pred_region
      %35 = dma.done [#allocation6], 128
    $region17: #{tpu_custom_call.1} parent=1 // pred_fallthru
      _
    %v36 = vld [vmem:[#allocation2] sm:$0xff]
    %v37 = vld [vmem:[#allocation5] sm:$0xff]
    %v38 = vmul.f32 %v36, %v36
    %39 = vadd.xlane.f32.xlu0 %v38
    %v40 = vpop.xlane.xlu0 %39
    %v41 = vmul.f32 %v37, %v37
    %42 = vadd.xlane.f32.xlu0 %v41
    %v43 = vpop.xlane.xlu0 %42
    %44 = vmatprep.subr.mxu0 0.0
    %45 = vmatpush1.xpose.msra.mxu0 %v36
    %46 = vmatprep.subr.mxu0 0.0
    %47 = vmatpush1.xpose.msra.mxu0 0.0
    %48 = vmatprep.subr.mxu0 0.0
    %49 = vmatpush1.xpose.msra.mxu0 0.0
    %50 = vmatprep.subr.mxu0 0.0
    %51 = vmatpush1.xpose.msra.mxu0 0.0
    %52 = vmatprep.subr.mxu0 0.0
    %53 = vmatpush1.xpose.msra.mxu0 0.0
    %54 = vmatprep.subr.mxu0 0.0
    %55 = vmatpush1.xpose.msra.mxu0 0.0
    %56 = vmatprep.subr.mxu0 0.0
    %57 = vmatpush1.xpose.msra.mxu0 0.0
    %58 = vmatprep.subr.mxu0 0.0
    %59 = vmatpush1.xpose.msra.mxu0 0.0
    %60 = vmatprep.subr.mxu0 0.0
    %61 = vmatpush1.xpose.msra.mxu0 0.0
    %62 = vmatprep.subr.mxu0 0.0
    %63 = vmatpush1.xpose.msra.mxu0 0.0
    %64 = vmatprep.subr.mxu0 0.0
    %65 = vmatpush1.xpose.msra.mxu0 0.0
    %66 = vmatprep.subr.mxu0 0.0
    %67 = vmatpush1.xpose.msra.mxu0 0.0
    %68 = vmatprep.subr.mxu0 0.0
    %69 = vmatpush1.xpose.msra.mxu0 0.0
    %70 = vmatprep.subr.mxu0 0.0
    %71 = vmatpush1.xpose.msra.mxu0 0.0
    %72 = vmatprep.subr.mxu0 0.0
    %73 = vmatpush1.xpose.msra.mxu0 0.0
    %74 = vmatprep.subr.mxu0 0.0
    %75 = vmatpush1.xpose.msra.mxu0 0.0
    %76 = vmatprep.subr.mxu0 0.0
    %77 = vmatpush1.xpose.msra.mxu0 0.0
    %78 = vmatprep.subr.mxu0 0.0
    %79 = vmatpush1.xpose.msra.mxu0 0.0
    %80 = vmatprep.subr.mxu0 0.0
    %81 = vmatpush1.xpose.msra.mxu0 0.0
    %82 = vmatprep.subr.mxu0 0.0
    %83 = vmatpush1.xpose.msra.mxu0 0.0
    %84 = vmatprep.subr.mxu0 0.0
    %85 = vmatpush1.xpose.msra.mxu0 0.0
    %86 = vmatprep.subr.mxu0 0.0
    %87 = vmatpush1.xpose.msra.mxu0 0.0
    %88 = vmatprep.subr.mxu0 0.0
    %89 = vmatpush1.xpose.msra.mxu0 0.0
    %90 = vmatprep.subr.mxu0 0.0
    %91 = vmatpush1.xpose.msra.mxu0 0.0
    %92 = vmatprep.subr.mxu0 0.0
    %93 = vmatpush1.xpose.msra.mxu0 0.0
    %94 = vmatprep.subr.mxu0 0.0
    %95 = vmatpush1.xpose.msra.mxu0 0.0
    %96 = vmatprep.subr.mxu0 0.0
    %97 = vmatpush1.xpose.msra.mxu0 0.0
    %98 = vmatprep.subr.mxu0 0.0
    %99 = vmatpush1.xpose.msra.mxu0 0.0
    %100 = vmatprep.subr.mxu0 0.0
    %101 = vmatpush1.xpose.msra.mxu0 0.0
    %102 = vmatprep.subr.mxu0 0.0
    %103 = vmatpush1.xpose.msra.mxu0 0.0
    %104 = vmatprep.subr.mxu0 0.0
    %105 = vmatpush1.xpose.msra.mxu0 0.0
    %106 = vmatprep.subr.mxu0 0.0
    %107 = vmatpush1.xpose.msra.mxu0 0.0
    %108 = vmatprep.mubr.f32.mxu0 0.0
    %109 = vmatmul.mubr.f32.gmra.mrb[0].mxu0 %v36
    %v110 = vpop.f32.mrb[0].mxu0
    %v111 = vadd.f32 0.0, %v110
    %v112 = vpop.f32.mrb[0].mxu0
    %113 = vdwg.mxu0
    %114 = vmatprep.subr.mxu0 0.0
    %115 = vmatpush1.xpose.msra.mxu0 %v37
    %116 = vmatprep.subr.mxu0 0.0
    %117 = vmatpush1.xpose.msra.mxu0 0.0
    %118 = vmatprep.subr.mxu0 0.0
    %119 = vmatpush1.xpose.msra.mxu0 0.0
    %120 = vmatprep.subr.mxu0 0.0
    %121 = vmatpush1.xpose.msra.mxu0 0.0
    %122 = vmatprep.subr.mxu0 0.0
    %123 = vmatpush1.xpose.msra.mxu0 0.0
    %124 = vmatprep.subr.mxu0 0.0
    %125 = vmatpush1.xpose.msra.mxu0 0.0
    %126 = vmatprep.subr.mxu0 0.0
    %127 = vmatpush1.xpose.msra.mxu0 0.0
    %128 = vmatprep.subr.mxu0 0.0
    %129 = vmatpush1.xpose.msra.mxu0 0.0
    %130 = vmatprep.subr.mxu0 0.0
    %131 = vmatpush1.xpose.msra.mxu0 0.0
    %132 = vmatprep.subr.mxu0 0.0
    %133 = vmatpush1.xpose.msra.mxu0 0.0
    %134 = vmatprep.subr.mxu0 0.0
    %135 = vmatpush1.xpose.msra.mxu0 0.0
    %136 = vmatprep.subr.mxu0 0.0
    %137 = vmatpush1.xpose.msra.mxu0 0.0
    %138 = vmatprep.subr.mxu0 0.0
    %139 = vmatpush1.xpose.msra.mxu0 0.0
    %140 = vmatprep.subr.mxu0 0.0
    %141 = vmatpush1.xpose.msra.mxu0 0.0
    %142 = vmatprep.subr.mxu0 0.0
    %143 = vmatpush1.xpose.msra.mxu0 0.0
    %144 = vmatprep.subr.mxu0 0.0
    %145 = vmatpush1.xpose.msra.mxu0 0.0
    %146 = vmatprep.subr.mxu0 0.0
    %147 = vmatpush1.xpose.msra.mxu0 0.0
    %148 = vmatprep.subr.mxu0 0.0
    %149 = vmatpush1.xpose.msra.mxu0 0.0
    %150 = vmatprep.subr.mxu0 0.0
    %151 = vmatpush1.xpose.msra.mxu0 0.0
    %152 = vmatprep.subr.mxu0 0.0
    %153 = vmatpush1.xpose.msra.mxu0 0.0
    %154 = vmatprep.subr.mxu0 0.0
    %155 = vmatpush1.xpose.msra.mxu0 0.0
    %156 = vmatprep.subr.mxu0 0.0
    %157 = vmatpush1.xpose.msra.mxu0 0.0
    %158 = vmatprep.subr.mxu0 0.0
    %159 = vmatpush1.xpose.msra.mxu0 0.0
    %160 = vmatprep.subr.mxu0 0.0
    %161 = vmatpush1.xpose.msra.mxu0 0.0
    %162 = vmatprep.subr.mxu0 0.0
    %163 = vmatpush1.xpose.msra.mxu0 0.0
    %164 = vmatprep.subr.mxu0 0.0
    %165 = vmatpush1.xpose.msra.mxu0 0.0
    %166 = vmatprep.subr.mxu0 0.0
    %167 = vmatpush1.xpose.msra.mxu0 0.0
    %168 = vmatprep.subr.mxu0 0.0
    %169 = vmatpush1.xpose.msra.mxu0 0.0
    %170 = vmatprep.subr.mxu0 0.0
    %171 = vmatpush1.xpose.msra.mxu0 0.0
    %172 = vmatprep.subr.mxu0 0.0
    %173 = vmatpush1.xpose.msra.mxu0 0.0
    %174 = vmatprep.subr.mxu0 0.0
    %175 = vmatpush1.xpose.msra.mxu0 0.0
    %176 = vmatprep.subr.mxu0 0.0
    %177 = vmatpush1.xpose.msra.mxu0 0.0
    %178 = vmatprep.mubr.f32.mxu0 0.0
    %179 = vmatmul.mubr.f32.gmra.mrb[0].mxu0 %v37
    %v180 = vpop.f32.mrb[0].mxu0
    %v181 = vadd.f32 0.0, %v180
    %v182 = vpop.f32.mrb[0].mxu0
    %183 = vdwg.mxu0
    %184 = vmatprep.subr.mxu0 0.0
    %185 = vmatpush1.xpose.msra.mxu0 %v37
    %186 = vmatprep.subr.mxu0 0.0
    %187 = vmatpush1.xpose.msra.mxu0 0.0
    %188 = vmatprep.subr.mxu0 0.0
    %189 = vmatpush1.xpose.msra.mxu0 0.0
    %190 = vmatprep.subr.mxu0 0.0
    %191 = vmatpush1.xpose.msra.mxu0 0.0
    %192 = vmatprep.subr.mxu0 0.0
    %193 = vmatpush1.xpose.msra.mxu0 0.0
    %194 = vmatprep.subr.mxu0 0.0
    %195 = vmatpush1.xpose.msra.mxu0 0.0
    %196 = vmatprep.subr.mxu0 0.0
    %197 = vmatpush1.xpose.msra.mxu0 0.0
    %198 = vmatprep.subr.mxu0 0.0
    %199 = vmatpush1.xpose.msra.mxu0 0.0
    %200 = vmatprep.subr.mxu0 0.0
    %201 = vmatpush1.xpose.msra.mxu0 0.0
    %202 = vmatprep.subr.mxu0 0.0
    %203 = vmatpush1.xpose.msra.mxu0 0.0
    %204 = vmatprep.subr.mxu0 0.0
    %205 = vmatpush1.xpose.msra.mxu0 0.0
    %206 = vmatprep.subr.mxu0 0.0
    %207 = vmatpush1.xpose.msra.mxu0 0.0
    %208 = vmatprep.subr.mxu0 0.0
    %209 = vmatpush1.xpose.msra.mxu0 0.0
    %210 = vmatprep.subr.mxu0 0.0
    %211 = vmatpush1.xpose.msra.mxu0 0.0
    %212 = vmatprep.subr.mxu0 0.0
    %213 = vmatpush1.xpose.msra.mxu0 0.0
    %214 = vmatprep.subr.mxu0 0.0
    %215 = vmatpush1.xpose.msra.mxu0 0.0
    %216 = vmatprep.subr.mxu0 0.0
    %217 = vmatpush1.xpose.msra.mxu0 0.0
    %218 = vmatprep.subr.mxu0 0.0
    %219 = vmatpush1.xpose.msra.mxu0 0.0
    %220 = vmatprep.subr.mxu0 0.0
    %221 = vmatpush1.xpose.msra.mxu0 0.0
    %222 = vmatprep.subr.mxu0 0.0
    %223 = vmatpush1.xpose.msra.mxu0 0.0
    %224 = vmatprep.subr.mxu0 0.0
    %225 = vmatpush1.xpose.msra.mxu0 0.0
    %226 = vmatprep.subr.mxu0 0.0
    %227 = vmatpush1.xpose.msra.mxu0 0.0
    %228 = vmatprep.subr.mxu0 0.0
    %229 = vmatpush1.xpose.msra.mxu0 0.0
    %230 = vmatprep.subr.mxu0 0.0
    %231 = vmatpush1.xpose.msra.mxu0 0.0
    %232 = vmatprep.subr.mxu0 0.0
    %233 = vmatpush1.xpose.msra.mxu0 0.0
    %234 = vmatprep.subr.mxu0 0.0
    %235 = vmatpush1.xpose.msra.mxu0 0.0
    %236 = vmatprep.subr.mxu0 0.0
    %237 = vmatpush1.xpose.msra.mxu0 0.0
    %238 = vmatprep.subr.mxu0 0.0
    %239 = vmatpush1.xpose.msra.mxu0 0.0
    %240 = vmatprep.subr.mxu0 0.0
    %241 = vmatpush1.xpose.msra.mxu0 0.0
    %242 = vmatprep.subr.mxu0 0.0
    %243 = vmatpush1.xpose.msra.mxu0 0.0
    %244 = vmatprep.subr.mxu0 0.0
    %245 = vmatpush1.xpose.msra.mxu0 0.0
    %246 = vmatprep.subr.mxu0 0.0
    %247 = vmatpush1.xpose.msra.mxu0 0.0
    %248 = vmatprep.mubr.f32.mxu0 0.0
    %249 = vmatmul.mubr.f32.gmra.mrb[0].mxu0 %v36
    %v250 = vpop.f32.mrb[0].mxu0
    %v251 = vadd.f32 0.0, %v250
    %v252 = vpop.f32.mrb[0].mxu0
    %253 = vdwg.mxu0
    %254 = vxpose.xlu0.b32.start [1/16] %v40, 128
    %255 = vxpose.xlu0.b32.cont [2/16] 0.0, 128
    %256 = vxpose.xlu0.b32.cont [3/16] 0.0, 128
    %257 = vxpose.xlu0.b32.cont [4/16] 0.0, 128
    %258 = vxpose.xlu0.b32.cont [5/16] 0.0, 128
    %259 = vxpose.xlu0.b32.cont [6/16] 0.0, 128
    %260 = vxpose.xlu0.b32.cont [7/16] 0.0, 128
    %261 = vxpose.xlu0.b32.cont [8/16] 0.0, 128
    %262 = vxpose.xlu0.b32.cont [9/16] 0.0, 128
    %263 = vxpose.xlu0.b32.cont [10/16] 0.0, 128
    %264 = vxpose.xlu0.b32.cont [11/16] 0.0, 128
    %265 = vxpose.xlu0.b32.cont [12/16] 0.0, 128
    %266 = vxpose.xlu0.b32.cont [13/16] 0.0, 128
    %267 = vxpose.xlu0.b32.cont [14/16] 0.0, 128
    %268 = vxpose.xlu0.b32.cont [15/16] 0.0, 128
    %269 = vxpose.xlu0.b32.end [16/16] 0.0, 128
    %v270 = vpop.trf.xlu0
    %v271 = vpop.trf.xlu0
    %v272 = vpop.trf.xlu0
    %v273 = vpop.trf.xlu0
    %v274 = vpop.trf.xlu0
    %v275 = vpop.trf.xlu0
    %v276 = vpop.trf.xlu0
    %v277 = vpop.trf.xlu0
    %v278 = vpop.trf.xlu0
    %v279 = vpop.trf.xlu0
    %v280 = vpop.trf.xlu0
    %v281 = vpop.trf.xlu0
    %v282 = vpop.trf.xlu0
    %v283 = vpop.trf.xlu0
    %v284 = vpop.trf.xlu0
    %v285 = vpop.trf.xlu0
    %v286 = vlaneseq
    %v287 = vshrl.u32 %v286, 7
    %v288 = vsub.s32 0, %v287
    %v289 = vrot.slane %v270, %v288
    %v290 = vadd.f32 %v40, %v289
    %v291 = vmul.f32 %v111, 2.0
    %v292 = vsub.f32 %v290, %v291
    %v293 = vmax.f32 %v292, 0.0
    %294 = vxpose.xlu0.b32.start [1/16] %v43, 128
    %295 = vxpose.xlu0.b32.cont [2/16] 0.0, 128
    %296 = vxpose.xlu0.b32.cont [3/16] 0.0, 128
    %297 = vxpose.xlu0.b32.cont [4/16] 0.0, 128
    %298 = vxpose.xlu0.b32.cont [5/16] 0.0, 128
    %299 = vxpose.xlu0.b32.cont [6/16] 0.0, 128
    %300 = vxpose.xlu0.b32.cont [7/16] 0.0, 128
    %301 = vxpose.xlu0.b32.cont [8/16] 0.0, 128
    %302 = vxpose.xlu0.b32.cont [9/16] 0.0, 128
    %303 = vxpose.xlu0.b32.cont [10/16] 0.0, 128
    %304 = vxpose.xlu0.b32.cont [11/16] 0.0, 128
    %305 = vxpose.xlu0.b32.cont [12/16] 0.0, 128
    %306 = vxpose.xlu0.b32.cont [13/16] 0.0, 128
    %307 = vxpose.xlu0.b32.cont [14/16] 0.0, 128
    %308 = vxpose.xlu0.b32.cont [15/16] 0.0, 128
    %309 = vxpose.xlu0.b32.end [16/16] 0.0, 128
    %v310 = vpop.trf.xlu0
    %v311 = vpop.trf.xlu0
    %v312 = vpop.trf.xlu0
    %v313 = vpop.trf.xlu0
    %v314 = vpop.trf.xlu0
    %v315 = vpop.trf.xlu0
    %v316 = vpop.trf.xlu0
    %v317 = vpop.trf.xlu0
    %v318 = vpop.trf.xlu0
    %v319 = vpop.trf.xlu0
    %v320 = vpop.trf.xlu0
    %v321 = vpop.trf.xlu0
    %v322 = vpop.trf.xlu0
    %v323 = vpop.trf.xlu0
    %v324 = vpop.trf.xlu0
    %v325 = vpop.trf.xlu0
    %v326 = vlaneseq
    %v327 = vshrl.u32 %v326, 7
    %v328 = vsub.s32 0, %v327
    %v329 = vrot.slane %v310, %v328
    %v330 = vadd.f32 %v43, %v329
    %v331 = vmul.f32 %v181, 2.0
    %v332 = vsub.f32 %v330, %v331
    %v333 = vmax.f32 %v332, 0.0
    %v334 = vadd.f32 %v40, %v329
    %v335 = vmul.f32 %v251, 2.0
    %v336 = vsub.f32 %v334, %v335
    %v337 = vmax.f32 %v336, 0.0
    %vm338 = vcmask 64512
    %v339 = vsel %vm338, %v293, 0.0
    %340 = vadd.xlane.f32.xlu0 %v339
    %v341 = vpop.xlane.xlu0 %340
    %v342 = vrot.slane %v341, 4
    %v343 = vadd.f32 %v341, %v342
    %v344 = vrot.slane %v343, 2
    %v345 = vadd.f32 %v343, %v344
    %v346 = vrot.slane %v345, 1
    %v347 = vadd.f32 %v345, %v346
    %s348 = vtos %v347
    %v349 = vsel %vm338, %v333, 0.0
    %350 = vadd.xlane.f32.xlu0 %v349
    %v351 = vpop.xlane.xlu0 %350
    %v352 = vrot.slane %v351, 4
    %v353 = vadd.f32 %v351, %v352
    %v354 = vrot.slane %v353, 2
    %v355 = vadd.f32 %v353, %v354
    %v356 = vrot.slane %v355, 1
    %v357 = vadd.f32 %v355, %v356
    %s358 = vtos %v357
    %s359 = sadd.f32 %s348, %s358
    %v360 = vsel %vm338, %v337, 0.0
    %361 = vadd.xlane.f32.xlu0 %v360
    %v362 = vpop.xlane.xlu0 %361
    %v363 = vrot.slane %v362, 4
    %v364 = vadd.f32 %v362, %v363
    %v365 = vrot.slane %v364, 2
    %v366 = vadd.f32 %v364, %v365
    %v367 = vrot.slane %v366, 1
    %v368 = vadd.f32 %v366, %v367
    %s369 = vtos %v368
    %s370 = smul.f32 %s369, 2.0
    %s371 = sadd.f32 %s359, %s370
    %v372 = vrcp.pop 240.0
    %s373 = vtos %v372
    %s374 = smul.f32 %s371, %s373
    %v375 = vrcp.pop 4.0
    %s376 = vtos %v375
    %s377 = smul.f32 %s374, %s376
    %v378 = vstv %s377
    %v379 = vrcp.pop %v378
    %s380 = vtos %v379
    %s381 = smul.f32 -1.0, %s380
    %v382 = vstv %s381
    %v383 = vmul.f32 %v293, %v382
    %v384 = vmul.f32 %v383, 1.442695
    %v385 = vpow.pop %v384
    %v386 = vsel %vm338, %v385, 0.0
    %387 = vadd.xlane.f32.xlu0 %v386
    %v388 = vpop.xlane.xlu0 %387
    %v389 = vrot.slane %v388, 4
    %v390 = vadd.f32 %v388, %v389
    %v391 = vrot.slane %v390, 2
    %v392 = vadd.f32 %v390, %v391
    %v393 = vrot.slane %v392, 1
    %v394 = vadd.f32 %v392, %v393
    %s395 = vtos %v394
    %s396 = sadd.f32 %s395, 0.0
    %v397 = vmul.f32 %v333, %v382
    %v398 = vmul.f32 %v397, 1.442695
    %v399 = vpow.pop %v398
    %v400 = vsel %vm338, %v399, 0.0
    %401 = vadd.xlane.f32.xlu0 %v400
    %v402 = vpop.xlane.xlu0 %401
    %v403 = vrot.slane %v402, 4
    %v404 = vadd.f32 %v402, %v403
    %v405 = vrot.slane %v404, 2
    %v406 = vadd.f32 %v404, %v405
    %v407 = vrot.slane %v406, 1
    %v408 = vadd.f32 %v406, %v407
    %s409 = vtos %v408
    %s410 = sadd.f32 %s409, 0.0
    %v411 = vmul.f32 %v337, %v382
    %v412 = vmul.f32 %v411, 1.442695
    %v413 = vpow.pop %v412
    %v414 = vsel %vm338, %v413, 0.0
    %415 = vadd.xlane.f32.xlu0 %v414
    %v416 = vpop.xlane.xlu0 %415
    %v417 = vrot.slane %v416, 4
    %v418 = vadd.f32 %v416, %v417
    %v419 = vrot.slane %v418, 2
    %v420 = vadd.f32 %v418, %v419
    %v421 = vrot.slane %v420, 1
    %v422 = vadd.f32 %v420, %v421
    %s423 = vtos %v422
    %s424 = sadd.f32 %s423, 0.0
    %s425 = smul.f32 %s381, 0.5
    %v426 = vstv %s425
    %v427 = vmul.f32 %v293, %v426
    %v428 = vmul.f32 %v427, 1.442695
    %v429 = vpow.pop %v428
    %v430 = vsel %vm338, %v429, 0.0
    %431 = vadd.xlane.f32.xlu0 %v430
    %v432 = vpop.xlane.xlu0 %431
    %v433 = vrot.slane %v432, 4
    %v434 = vadd.f32 %v432, %v433
    %v435 = vrot.slane %v434, 2
    %v436 = vadd.f32 %v434, %v435
    %v437 = vrot.slane %v436, 1
    %v438 = vadd.f32 %v436, %v437
    %s439 = vtos %v438
    %s440 = sadd.f32 %s396, %s439
    %v441 = vmul.f32 %v333, %v426
    %v442 = vmul.f32 %v441, 1.442695
    %v443 = vpow.pop %v442
    %v444 = vsel %vm338, %v443, 0.0
    %445 = vadd.xlane.f32.xlu0 %v444
    %v446 = vpop.xlane.xlu0 %445
    %v447 = vrot.slane %v446, 4
    %v448 = vadd.f32 %v446, %v447
    %v449 = vrot.slane %v448, 2
    %v450 = vadd.f32 %v448, %v449
    %v451 = vrot.slane %v450, 1
    %v452 = vadd.f32 %v450, %v451
    %s453 = vtos %v452
    %s454 = sadd.f32 %s410, %s453
    %v455 = vmul.f32 %v337, %v426
    %v456 = vmul.f32 %v455, 1.442695
    %v457 = vpow.pop %v456
    %v458 = vsel %vm338, %v457, 0.0
    %459 = vadd.xlane.f32.xlu0 %v458
    %v460 = vpop.xlane.xlu0 %459
    %v461 = vrot.slane %v460, 4
    %v462 = vadd.f32 %v460, %v461
    %v463 = vrot.slane %v462, 2
    %v464 = vadd.f32 %v462, %v463
    %v465 = vrot.slane %v464, 1
    %v466 = vadd.f32 %v464, %v465
    %s467 = vtos %v466
    %s468 = sadd.f32 %s424, %s467
    %s469 = smul.f32 %s381, 0.25
    %v470 = vstv %s469
    %v471 = vmul.f32 %v293, %v470
    %v472 = vmul.f32 %v471, 1.442695
    %v473 = vpow.pop %v472
    %v474 = vsel %vm338, %v473, 0.0
    %475 = vadd.xlane.f32.xlu0 %v474
    %v476 = vpop.xlane.xlu0 %475
    %v477 = vrot.slane %v476, 4
    %v478 = vadd.f32 %v476, %v477
    %v479 = vrot.slane %v478, 2
    %v480 = vadd.f32 %v478, %v479
    %v481 = vrot.slane %v480, 1
    %v482 = vadd.f32 %v480, %v481
    %s483 = vtos %v482
    %s484 = sadd.f32 %s440, %s483
    %v485 = vmul.f32 %v333, %v470
    %v486 = vmul.f32 %v485, 1.442695
    %v487 = vpow.pop %v486
    %v488 = vsel %vm338, %v487, 0.0
    %489 = vadd.xlane.f32.xlu0 %v488
    %v490 = vpop.xlane.xlu0 %489
    %v491 = vrot.slane %v490, 4
    %v492 = vadd.f32 %v490, %v491
    %v493 = vrot.slane %v492, 2
    %v494 = vadd.f32 %v492, %v493
    %v495 = vrot.slane %v494, 1
    %v496 = vadd.f32 %v494, %v495
    %s497 = vtos %v496
    %s498 = sadd.f32 %s454, %s497
    %v499 = vmul.f32 %v337, %v470
    %v500 = vmul.f32 %v499, 1.442695
    %v501 = vpow.pop %v500
    %v502 = vsel %vm338, %v501, 0.0
    %503 = vadd.xlane.f32.xlu0 %v502
    %v504 = vpop.xlane.xlu0 %503
    %v505 = vrot.slane %v504, 4
    %v506 = vadd.f32 %v504, %v505
    %v507 = vrot.slane %v506, 2
    %v508 = vadd.f32 %v506, %v507
    %v509 = vrot.slane %v508, 1
    %v510 = vadd.f32 %v508, %v509
    %s511 = vtos %v510
    %s512 = sadd.f32 %s468, %s511
    %s513 = smul.f32 %s381, 0.125
    %v514 = vstv %s513
    %v515 = vmul.f32 %v293, %v514
    %v516 = vmul.f32 %v515, 1.442695
    %v517 = vpow.pop %v516
    %v518 = vsel %vm338, %v517, 0.0
    %519 = vadd.xlane.f32.xlu0 %v518
    %v520 = vpop.xlane.xlu0 %519
    %v521 = vrot.slane %v520, 4
    %v522 = vadd.f32 %v520, %v521
    %v523 = vrot.slane %v522, 2
    %v524 = vadd.f32 %v522, %v523
    %v525 = vrot.slane %v524, 1
    %v526 = vadd.f32 %v524, %v525
    %s527 = vtos %v526
    %s528 = sadd.f32 %s484, %s527
    %v529 = vmul.f32 %v333, %v514
    %v530 = vmul.f32 %v529, 1.442695
    %v531 = vpow.pop %v530
    %v532 = vsel %vm338, %v531, 0.0
    %533 = vadd.xlane.f32.xlu0 %v532
    %v534 = vpop.xlane.xlu0 %533
    %v535 = vrot.slane %v534, 4
    %v536 = vadd.f32 %v534, %v535
    %v537 = vrot.slane %v536, 2
    %v538 = vadd.f32 %v536, %v537
    %v539 = vrot.slane %v538, 1
    %v540 = vadd.f32 %v538, %v539
    %s541 = vtos %v540
    %s542 = sadd.f32 %s498, %s541
    %v543 = vmul.f32 %v337, %v514
    %v544 = vmul.f32 %v543, 1.442695
    %v545 = vpow.pop %v544
    %v546 = vsel %vm338, %v545, 0.0
    %547 = vadd.xlane.f32.xlu0 %v546
    %v548 = vpop.xlane.xlu0 %547
    %v549 = vrot.slane %v548, 4
    %v550 = vadd.f32 %v548, %v549
    %v551 = vrot.slane %v550, 2
    %v552 = vadd.f32 %v550, %v551
    %v553 = vrot.slane %v552, 1
    %v554 = vadd.f32 %v552, %v553
    %s555 = vtos %v554
    %s556 = sadd.f32 %s512, %s555
    %s557 = smul.f32 %s381, 0.0625
    %v558 = vstv %s557
    %v559 = vmul.f32 %v293, %v558
    %v560 = vmul.f32 %v559, 1.442695
    %v561 = vpow.pop %v560
    %v562 = vsel %vm338, %v561, 0.0
    %563 = vadd.xlane.f32.xlu0 %v562
    %v564 = vpop.xlane.xlu0 %563
    %v565 = vrot.slane %v564, 4
    %v566 = vadd.f32 %v564, %v565
    %v567 = vrot.slane %v566, 2
    %v568 = vadd.f32 %v566, %v567
    %v569 = vrot.slane %v568, 1
    %v570 = vadd.f32 %v568, %v569
    %s571 = vtos %v570
    %s572 = sadd.f32 %s528, %s571
    %v573 = vmul.f32 %v333, %v558
    %v574 = vmul.f32 %v573, 1.442695
    %v575 = vpow.pop %v574
    %v576 = vsel %vm338, %v575, 0.0
    %577 = vadd.xlane.f32.xlu0 %v576
    %v578 = vpop.xlane.xlu0 %577
    %v579 = vrot.slane %v578, 4
    %v580 = vadd.f32 %v578, %v579
    %v581 = vrot.slane %v580, 2
    %v582 = vadd.f32 %v580, %v581
    %v583 = vrot.slane %v582, 1
    %v584 = vadd.f32 %v582, %v583
    %s585 = vtos %v584
    %s586 = sadd.f32 %s542, %s585
    %v587 = vmul.f32 %v337, %v558
    %v588 = vmul.f32 %v587, 1.442695
    %v589 = vpow.pop %v588
    %v590 = vsel %vm338, %v589, 0.0
    %591 = vadd.xlane.f32.xlu0 %v590
    %v592 = vpop.xlane.xlu0 %591
    %v593 = vrot.slane %v592, 4
    %v594 = vadd.f32 %v592, %v593
    %v595 = vrot.slane %v594, 2
    %v596 = vadd.f32 %v594, %v595
    %v597 = vrot.slane %v596, 1
    %v598 = vadd.f32 %v596, %v597
    %s599 = vtos %v598
    %s600 = sadd.f32 %s556, %s599
    %v601 = vrcp.pop 64.0
    %s602 = vtos %v601
    %s603 = smul.f32 %s572, %s602
    %v604 = vrcp.pop 64.0
    %s605 = vtos %v604
    %s606 = smul.f32 %s586, %s605
    %s607 = sadd.f32 %s603, %s606
    %s608 = smul.f32 %s600, 2.0
    %v609 = vrcp.pop 64.0
    %s610 = vtos %v609
    %s611 = smul.f32 %s608, %s610
    %s612 = ssub.f32 %s607, %s611
    %s613 = scalar_lea.smem [#allocation7], 0
    %614 = sst [smem:[%s613]] %s612
    // Predicated region
    $region18: #{tpu_custom_call.1} parent=1 // pred_check
      _
    $region19: #{tpu_custom_call.1} parent=1 // pred_check_branch
      %616 = sbr.rel (0) target = $region21
    $region20: #{tpu_custom_call.1} parent=1 // pred_region
      %s618 = ssub.s32 16, 16
      %619 = vsyncadd [#allocation4], %s618
      %622 = dma.smem_to_hbm [#allocation7], 16, %s2, [#allocation4]
    $region21: #{tpu_custom_call.1} parent=1 // pred_fallthru
      _
    // Predicated region
    $region22: #{tpu_custom_call.1} parent=1 // pred_check
      _
    $region23: #{tpu_custom_call.1} parent=1 // pred_check_branch
      %624 = sbr.rel (0) target = $region25
    $region24: #{tpu_custom_call.1} parent=1 // pred_region
      %625 = dma.done [#allocation4], 16
    $region25: #{tpu_custom_call.1} parent=1 // pred_fallthru
      _
    %626 = sfence
    %627 = vsyncpa [#allocation3], 1
    %628 = vsyncpa [#allocation6], 1
    %629 = vsyncpa [#allocation4], 1

</llo_original>
